<compile_context>
chip_gen: v7x
topology: tpu7x:2x2x1
jax: 0.10.0
libtpu: 0.0.40
codegen_flags: <defaults>
</compile_context>

<pallas_src>
import math

import jax
import jax.numpy as jnp
from jax.experimental import pallas as pl
from jax.experimental.pallas import tpu as pltpu


# ------------------------------------------------------------------ PE table (the buffer)
def make_pe_table(seq_len, d_model):
    """Sinusoidal PE table (seq_len, d_model) f32, exactly matching the PyTorch buffer."""
    position = jnp.arange(seq_len, dtype=jnp.float32)[:, None]                 # (S, 1)
    div_term = jnp.exp(jnp.arange(0, d_model, 2, dtype=jnp.float32)
                       * -(math.log(10000.0) / d_model))                       # (D/2,)
    pe = jnp.zeros((seq_len, d_model), dtype=jnp.float32)
    pe = pe.at[:, 0::2].set(jnp.sin(position * div_term))
    pe = pe.at[:, 1::2].set(jnp.cos(position * div_term))
    return pe


# --------------------------------------------------------------------------------- kernel
def pos_enc_kernel(x_ref, pe_ref, o_ref):
    """Broadcasted add. x_ref/o_ref: (bB, tS, D); pe_ref: (tS, D).

    Also used grid-less with x_ref/o_ref = (B, S, D), pe_ref = (S, D).
    The add promotes to f32 (pe is f32) and casts back to the input dtype, mirroring
    the module's x + pe with a registered float buffer.
    """
    o_ref[...] = (x_ref[...] + pe_ref[...][None, :, :]).astype(o_ref.dtype)


# ------------------------------------------------------------------------- tile selection
def _pick_seq_tile(S, row_bytes, block_bytes):
    """Sublane-aligned (multiple of 8) sequence tile whose (tS, D) slab fits block_bytes.

    Prefers a divisor of S (no ragged last block) and, when S is large enough, at least
    two sequence tiles so the 'parallel' seq grid axis can be split across both
    TensorCores on v7x.  If no aligned divisor exists, returns a fixed aligned tile and
    the caller uses pl.cdiv — Pallas masks the ragged last block (no more full-(S, D)
    fallback that could exceed VMEM).
    """
    if S <= 8:
        return S
    limit = max(8, block_bytes // max(1, row_bytes))
    # Prefer >= 2 seq tiles (dual-TC megacore balance on v7x; harmless elsewhere).
    half = -(-S // 2)
    half = -(-half // 8) * 8
    limit = min(limit, half, S)
    limit = max(8, (limit // 8) * 8)
    for t in range(limit, 7, -8):
        if S % t == 0:
            return t
    return limit


def _pick_batch_tile(B, seq_slab_bytes, block_bytes):
    """Largest divisor of B such that (bB, tS, D) still fits the per-block budget."""
    cap = min(B, max(1, block_bytes // max(1, seq_slab_bytes)))
    for b in range(cap, 0, -1):
        if B % b == 0:
            return b
    return 1


# -------------------------------------------------------------------------------- wrapper
def positional_encoding_add(x, *, block_bytes=4 * 1024 * 1024,
                            vmem_limit_bytes=48 * 1024 * 1024,
                            whole_array_bytes_max=128 * 1024):
    """x: (B, S, D). Returns x + pe[None, :S, :] with the module's sinusoidal PE."""
    B, S, D = x.shape
    itemsize = jnp.dtype(x.dtype).itemsize
    pe = make_pe_table(S, D)  # the module's (registered-buffer) table, f32

    cost = pl.CostEstimate(
        flops=B * S * D,
        transcendentals=0,
        bytes_accessed=2 * B * S * D * itemsize + S * D * 4,
    )

    # Tiny problem: single grid-less block, no pipeline setup overhead.
    if B * S * D * itemsize + S * D * 4 <= whole_array_bytes_max:
        return pl.pallas_call(
            pos_enc_kernel,
            out_shape=jax.ShapeDtypeStruct((B, S, D), x.dtype),
            cost_estimate=cost,
        )(x, pe)

    row_bytes = D * itemsize
    tS = _pick_seq_tile(S, row_bytes, block_bytes)
    bB = _pick_batch_tile(B, tS * row_bytes, block_bytes)
    # Batch innermost: the PE block index (s, 0) is unchanged across batch steps, so the
    # pipeline keeps the resident PE block instead of re-DMAing it.
    grid = (pl.cdiv(S, tS), B // bB)

    return pl.pallas_call(
        pos_enc_kernel,
        out_shape=jax.ShapeDtypeStruct((B, S, D), x.dtype),
        grid=grid,
        in_specs=[
            pl.BlockSpec((bB, tS, D), lambda s, b: (b, s, 0)),   # x tile
            pl.BlockSpec((tS, D), lambda s, b: (s, 0)),          # PE tile (batch-invariant)
        ],
        out_specs=pl.BlockSpec((bB, tS, D), lambda s, b: (b, s, 0)),
        compiler_params=pltpu.CompilerParams(
            # Seq tiles may be split across TensorCores; batch stays sequential per core
            # so the PE block is revisited (not re-fetched) across the batch loop.
            dimension_semantics=("parallel", "arbitrary"),
            vmem_limit_bytes=vmem_limit_bytes,
        ),
        cost_estimate=cost,
    )(x, pe)


# ------------------------------------------------------------------------------ reference
def reference_positional_encoding_add(x):
    """Pure-JAX reference mirroring the PyTorch module exactly."""
    B, S, D = x.shape
    position = jnp.arange(S, dtype=jnp.float32)[:, None]
    div_term = jnp.exp(jnp.arange(0, D, 2, dtype=jnp.float32) * -(math.log(10000.0) / D))
    pe = jnp.zeros((S, D), dtype=jnp.float32)
    pe = pe.at[:, 0::2].set(jnp.sin(position * div_term))
    pe = pe.at[:, 1::2].set(jnp.cos(position * div_term))
    return x + pe[None, :, :]


# ----------------------------------------------------------------------------------- test
if __name__ == "__main__":
    key = jax.random.PRNGKey(0)

    # Case 1: small module-consistent shape (grid-less path).
    B, S, D = 2, 8, 32
    x_small = jax.random.normal(key, (B, S, D), dtype=jnp.float32)
    out_small = jax.block_until_ready(positional_encoding_add(x_small))
    ref_small = reference_positional_encoding_add(x_small)
    assert out_small.shape == x_small.shape and out_small.dtype == x_small.dtype
    assert jnp.allclose(out_small, ref_small, atol=1e-5, rtol=1e-5), "small-path mismatch"

    # Case 2: tiled path, f32. block_bytes=64 KiB forces tS=128, bB=1 -> grid (2, 3);
    # exercises PE-block reuse across the innermost batch axis.
    x_big = jax.random.normal(jax.random.PRNGKey(1), (3, 256, 128), dtype=jnp.float32)
    out_big = jax.block_until_ready(
        positional_encoding_add(x_big, block_bytes=64 * 1024))
    ref_big = reference_positional_encoding_add(x_big)
    assert out_big.shape == x_big.shape and out_big.dtype == x_big.dtype
    assert jnp.allclose(out_big, ref_big, atol=1e-5, rtol=1e-5), "tiled-path mismatch"

    # Case 3: tiled path, bf16 input with the batch folded into the block
    # (block_bytes=128 KiB -> tS=64, bB=4 -> grid (2, 1)).
    x_bf = jax.random.normal(jax.random.PRNGKey(2), (4, 128, 256), dtype=jnp.bfloat16)
    out_bf = jax.block_until_ready(
        positional_encoding_add(x_bf, block_bytes=128 * 1024))
    ref_bf = (x_bf.astype(jnp.float32) + make_pe_table(128, 256)[None, :, :]
              ).astype(jnp.bfloat16)
    assert out_bf.shape == x_bf.shape and out_bf.dtype == jnp.bfloat16
    assert jnp.allclose(out_bf.astype(jnp.float32), ref_bf.astype(jnp.float32),
                        atol=1e-2, rtol=1e-2), "bf16-path mismatch"

    print("KERNEL_OK")
</pallas_src>

<mosaic_0001>
module attributes {stable_mosaic.version = 11 : i64} {
  func.func @pos_enc_kernel(%arg0: memref<2x8x32xf32, #tpu.memory_space<vmem>>, %arg1: memref<8x32xf32, #tpu.memory_space<vmem>>, %arg2: memref<2x8x32xf32, #tpu.memory_space<vmem>>) attributes {dimension_semantics = [], scalar_prefetch = 0 : i64, scratch_operands = 0 : i64, tpu.core_type = #tpu.core_type<tc>} {
    %c0 = arith.constant 0 : index
    %c0_0 = arith.constant 0 : index
    %c0_1 = arith.constant 0 : index
    %0 = vector.load %arg0[%c0, %c0_0, %c0_1] : memref<2x8x32xf32, #tpu.memory_space<vmem>>, vector<2x8x32xf32>
    %c0_2 = arith.constant 0 : index
    %c0_3 = arith.constant 0 : index
    %1 = vector.load %arg1[%c0_2, %c0_3] : memref<8x32xf32, #tpu.memory_space<vmem>>, vector<8x32xf32>
    %2 = vector.shape_cast %1 : vector<8x32xf32> to vector<1x8x32xf32>
    %3 = vector.broadcast %2 : vector<1x8x32xf32> to vector<2x8x32xf32>
    %4 = arith.addf %0, %3 : vector<2x8x32xf32>
    %c0_4 = arith.constant 0 : index
    %c0_5 = arith.constant 0 : index
    %c0_6 = arith.constant 0 : index
    %5 = vector.load %arg2[%c0_4, %c0_5, %c0_6] : memref<2x8x32xf32, #tpu.memory_space<vmem>>, vector<2x8x32xf32>
    tpu.vector_store %arg2[%c0_4, %c0_5, %c0_6], %4 {strides = array<i32>} : memref<2x8x32xf32, #tpu.memory_space<vmem>>, vector<2x8x32xf32>,
    return
  }
}

</mosaic_0001>

<llo_original>
// kernel: tpu_custom_call.1
$region0: #{tpu_custom_call.1}
  #allocation0 [shape = 'u32[]', space=smem, size = 0x4, offset = 0x4, fixed_abs, tag = 'smem constant byte address 0x4 - core index']
  #allocation1 [shape = 'u32[144,128]{1,0:T(1,128)}', space=vmem, size = 0x12000, scoped, tag = 'internal scratch']
  %s0 = inlined_call_operand.hbm [shape: f32[2,8,32], index: 0, kind: input, shape index: {}]
  %s1 = inlined_call_operand.hbm [shape: f32[8,32], index: 1, kind: input, shape index: {}]
  %s2 = inlined_call_operand.hbm [shape: f32[2,8,32], index: 2, kind: output, shape index: {}]
  %s3 = sld [smem:[#allocation0]]
  $region26: #{tpu_custom_call.1} parent=0
    _
  %s5 = ssub.s32 1, %s3
  %s6 = scalar_select 0, %s5, %s3
  $region1: #{tpu_custom_call.1} parent=0
    #allocation2 [shape = 'u8[8192]{0}', space=vmem, size = 0x2000, scoped, tag = 'input window, operand 0, single buffered']
    #allocation3 [shape = 's32[1]{0}', space=sflag, size = 0x4, scoped, tag = 'scoped memory for tpu_custom_call.1']
    #allocation4 [shape = 's32[1]{0}', space=sflag, size = 0x4, scoped, tag = 'scoped memory for tpu_custom_call.1']
    #allocation5 [shape = 'u8[4096]{0}', space=vmem, size = 0x1000, scoped, tag = 'input window, operand 1, single buffered']
    #allocation6 [shape = 's32[1]{0}', space=sflag, size = 0x4, scoped, tag = 'scoped memory for tpu_custom_call.1']
    #allocation7 [shape = 'u8[8192]{0}', space=vmem, size = 0x2000, scoped, tag = 'output window, operand 0, single buffered']
    %7 = vsyncpa [#allocation3], 0
    %8 = vsyncpa [#allocation6], 0
    %9 = vsyncpa [#allocation4], 0
    // Predicated region
    $region2: #{tpu_custom_call.1} parent=1 // pred_check
      _
    $region3: #{tpu_custom_call.1} parent=1 // pred_check_branch
      %11 = sbr.rel (0) target = $region5
    $region4: #{tpu_custom_call.1} parent=1 // pred_region
      %s13 = ssub.s32 256, 256
      %14 = vsyncadd [#allocation3], %s13
      %s15 = sshll.u32 [#allocation2], 4
      %s16 = int_to_ptr.vmem [resolvable:$true] %s15
      %21 = dma.hbm_to_vmem [thread:$0]  %s0, 256, %s16, [#allocation3], 128, 128, 8
    $region5: #{tpu_custom_call.1} parent=1 // pred_fallthru
      _
    // Predicated region
    $region6: #{tpu_custom_call.1} parent=1 // pred_check
      _
    $region7: #{tpu_custom_call.1} parent=1 // pred_check_branch
      %23 = sbr.rel (0) target = $region9
    $region8: #{tpu_custom_call.1} parent=1 // pred_region
      %s25 = ssub.s32 128, 128
      %26 = vsyncadd [#allocation6], %s25
      %s28 = sshll.u32 [#allocation5], 4
      %s29 = int_to_ptr.vmem [resolvable:$true] %s28
      %31 = dma.hbm_to_vmem [thread:$0]  %s1, 128, %s29, [#allocation6]
    $region9: #{tpu_custom_call.1} parent=1 // pred_fallthru
      _
    // Predicated region
    $region10: #{tpu_custom_call.1} parent=1 // pred_check
      _
    $region11: #{tpu_custom_call.1} parent=1 // pred_check_branch
      %33 = sbr.rel (0) target = $region13
    $region12: #{tpu_custom_call.1} parent=1 // pred_region
      %34 = dma.done [#allocation3], 256
    $region13: #{tpu_custom_call.1} parent=1 // pred_fallthru
      _
    // Predicated region
    $region14: #{tpu_custom_call.1} parent=1 // pred_check
      _
    $region15: #{tpu_custom_call.1} parent=1 // pred_check_branch
      %36 = sbr.rel (0) target = $region17
    $region16: #{tpu_custom_call.1} parent=1 // pred_region
      %37 = dma.done [#allocation6], 128
    $region17: #{tpu_custom_call.1} parent=1 // pred_fallthru
      _
    %v38 = vld [vmem:[#allocation2] sm:$0xff]
    %v39 = vld [vmem:[#allocation2 + $0x8] sm:$0xff]
    %v40 = vld [vmem:[#allocation5] sm:$0xff]
    %v41 = vadd.f32 %v38, %v40
    %v42 = vadd.f32 %v39, %v40
    %vm43 = vcmask 261120
    %44 = vst.msk [vmem:[#allocation7] sm:$0xff] %vm43, %v41
    %45 = vst.msk [vmem:[#allocation7 + $0x8] sm:$0xff] %vm43, %v42
    // Predicated region
    $region18: #{tpu_custom_call.1} parent=1 // pred_check
      _
    $region19: #{tpu_custom_call.1} parent=1 // pred_check_branch
      %47 = sbr.rel (0) target = $region21
    $region20: #{tpu_custom_call.1} parent=1 // pred_region
      %s49 = ssub.s32 256, 256
      %50 = vsyncadd [#allocation4], %s49
      %s51 = sshll.u32 [#allocation7], 4
      %s52 = int_to_ptr.vmem [resolvable:$true] %s51
      %57 = dma.vmem_to_hbm [thread:$0]  %s52, 256, %s2, [#allocation4], 128, 128, 8
    $region21: #{tpu_custom_call.1} parent=1 // pred_fallthru
      _
    // Predicated region
    $region22: #{tpu_custom_call.1} parent=1 // pred_check
      _
    $region23: #{tpu_custom_call.1} parent=1 // pred_check_branch
      %59 = sbr.rel (0) target = $region25
    $region24: #{tpu_custom_call.1} parent=1 // pred_region
      %60 = dma.done [#allocation4], 256
    $region25: #{tpu_custom_call.1} parent=1 // pred_fallthru
      _
    %61 = vsyncpa [#allocation3], 1
    %62 = vsyncpa [#allocation6], 1
    %63 = vsyncpa [#allocation4], 1

</llo_original>
